<compile_context>
chip_gen: v7x
topology: tpu7x:2x2x1
jax: 0.10.0
libtpu: 0.0.40
codegen_flags: <defaults>
</compile_context>

<pallas_src>
import jax
import jax.numpy as jnp
from jax import lax
from jax.experimental import pallas as pl
from jax.experimental.pallas import tpu as pltpu

_LANES = 128           # lane width (fast axis)
_MAX_BLOCK_ROWS = 512  # sublane rows per block: (512,128) f32 = 256 KiB/operand
_NCORES = 2            # max leading "parallel" grid axis (v7x megacore; serial elsewhere)
_OUT_ROWS = 8          # minimal (8,128) output tile per core


def _round_up(x, m):
    return (x + m - 1) // m * m


def _bfocal_partial_kernel(x_ref, t_ref, o_ref, acc_ref):
    j = pl.program_id(1)

    @pl.when(j == 0)
    def _():
        acc_ref[...] = jnp.zeros_like(acc_ref)

    x = x_ref[...].astype(jnp.float32)
    t = t_ref[...].astype(jnp.float32)
    # Numerically stable BCE-with-logits:
    #   -(t*log(sigmoid(x)) + (1-t)*log(1-sigmoid(x))) = softplus(x) - t*x
    acc_ref[...] += jax.nn.softplus(x) - t * x

    @pl.when(j == pl.num_programs(1) - 1)
    def _():
        # Single cross-lane/sublane reduction per core, done once.
        s = jnp.sum(acc_ref[...])
        r = lax.broadcasted_iota(jnp.int32, (_OUT_ROWS, _LANES), 0)
        l = lax.broadcasted_iota(jnp.int32, (_OUT_ROWS, _LANES), 1)
        o_ref[...] = jnp.where((r == 0) & (l == 0), s, jnp.float32(0.0))


def bfocal_loss(inputs, targets, alpha=0.8, gamma=2, smooth=1):
    """Pallas implementation of BFocalLoss.forward. Returns an f32 scalar."""
    del smooth  # unused by the reference forward (matches the PyTorch module)
    x = inputs.reshape(-1)
    t = targets.reshape(-1)
    n = x.shape[0]

    rows_min = pl.cdiv(n, _LANES)
    br = min(_MAX_BLOCK_ROWS, _round_up(rows_min, 8))   # block rows (mult. of 8)
    nblocks = pl.cdiv(rows_min, br)                     # row-blocks actually needed
    ncores = _NCORES if nblocks >= _NCORES else 1       # don't pad tiny inputs 2x
    nblocks = _round_up(nblocks, ncores)
    rows = nblocks * br
    n_pad = rows * _LANES

    if n_pad != n:
        # Neutral padding: softplus(-1e4) == 0 exactly and t == 0, so padded
        # elements contribute exactly 0 to the BCE sum -> no in-kernel mask.
        x = jnp.pad(x, (0, n_pad - n), constant_values=-1e4)
        t = jnp.pad(t, (0, n_pad - n))
    x = x.reshape(rows, _LANES)
    t = t.reshape(rows, _LANES)  # native dtype; cast to f32 in-kernel

    bpc = nblocks // ncores
    grid = (ncores, bpc)

    partials = pl.pallas_call(
        _bfocal_partial_kernel,
        out_shape=jax.ShapeDtypeStruct((ncores * _OUT_ROWS, _LANES), jnp.float32),
        grid_spec=pltpu.PrefetchScalarGridSpec(
            num_scalar_prefetch=0,
            grid=grid,
            in_specs=[
                pl.BlockSpec((br, _LANES), lambda c, j: (c * bpc + j, 0)),
                pl.BlockSpec((br, _LANES), lambda c, j: (c * bpc + j, 0)),
            ],
            out_specs=pl.BlockSpec((_OUT_ROWS, _LANES), lambda c, j: (c, 0)),
            scratch_shapes=[pltpu.VMEM((br, _LANES), jnp.float32)],
        ),
        compiler_params=pltpu.CompilerParams(
            dimension_semantics=("parallel", "arbitrary")),
    )(x, t)

    # Tiny scalar epilogue in the wrapper (combine the per-core partials).
    total = jnp.sum(partials)
    mean_bce = total / jnp.float32(n)
    bce_exp = jnp.exp(-mean_bce)
    base = 1.0 - bce_exp
    if isinstance(gamma, (int, float)) and float(gamma) == int(gamma):
        focal_w = lax.integer_pow(base, int(gamma))  # avoid generic pow (log/exp)
    else:
        focal_w = base ** gamma
    return alpha * focal_w * mean_bce


def _bfocal_loss_ref(inputs, targets, alpha=0.8, gamma=2):
    p = jax.nn.sigmoid(inputs.reshape(-1).astype(jnp.float32))
    t = targets.reshape(-1).astype(jnp.float32)
    bce = jnp.mean(-(t * jnp.log(p) + (1.0 - t) * jnp.log(1.0 - p)))
    return alpha * (1.0 - jnp.exp(-bce)) ** gamma * bce


if __name__ == "__main__":
    key = jax.random.PRNGKey(0)
    k1, k2, k3, k4, k5, k6 = jax.random.split(key, 6)

    # 1) NCHW, same convention as the PyTorch module's typical segmentation use.
    B, C, H, W = 2, 4, 16, 16
    inputs = jax.random.normal(k1, (B, C, H, W), dtype=jnp.float32)
    targets = (jax.random.uniform(k2, (B, C, H, W)) > 0.5).astype(jnp.float32)
    out = jax.block_until_ready(bfocal_loss(inputs, targets))
    ref = _bfocal_loss_ref(inputs, targets)
    assert jnp.allclose(out, ref, atol=1e-5, rtol=1e-5), (out, ref)

    # 2) Non-128-aligned shape + native (non-f32) target dtype exercises the
    #    neutral-padding path and the in-kernel target cast.
    inputs2 = jax.random.normal(k3, (3, 5, 7, 11), dtype=jnp.float32)
    targets2 = (jax.random.uniform(k4, (3, 5, 7, 11)) > 0.5)  # bool targets
    out2 = jax.block_until_ready(bfocal_loss(inputs2, targets2))
    ref2 = _bfocal_loss_ref(inputs2, targets2)
    assert jnp.allclose(out2, ref2, atol=1e-5, rtol=1e-5), (out2, ref2)

    # 3) Larger shape: exercises the multi-block / 2-core grid path.
    inputs3 = jax.random.normal(k5, (4, 8, 64, 64), dtype=jnp.float32)
    targets3 = (jax.random.uniform(k6, (4, 8, 64, 64)) > 0.5).astype(jnp.float32)
    out3 = jax.block_until_ready(bfocal_loss(inputs3, targets3))
    ref3 = _bfocal_loss_ref(inputs3, targets3)
    assert jnp.allclose(out3, ref3, atol=1e-5, rtol=1e-5), (out3, ref3)

    print("KERNEL_OK")
</pallas_src>

<mosaic_0001>
module attributes {stable_mosaic.version = 11 : i64} {
  func.func @_bfocal_partial_kernel(%arg0: i32, %arg1: i32, %arg2: memref<16x128xf32, #tpu.memory_space<vmem>>, %arg3: memref<16x128xf32, #tpu.memory_space<vmem>>, %arg4: memref<8x128xf32, #tpu.memory_space<vmem>>, %arg5: memref<16x128xf32, #tpu.memory_space<vmem>>) attributes {dimension_semantics = [#tpu.dimension_semantics<parallel>, #tpu.dimension_semantics<arbitrary>], iteration_bounds = array<i64: 1, 1>, scalar_prefetch = 0 : i64, scratch_operands = 1 : i64, tpu.core_type = #tpu.core_type<tc>, window_params = [{transform_indices = @transform_0, window_bounds = array<i64: 16, 128>}, {transform_indices = @transform_1, window_bounds = array<i64: 16, 128>}, {transform_indices = @transform_2, window_bounds = array<i64: 8, 128>}]} {
    %c0_i32 = arith.constant 0 : i32
    %0 = arith.cmpi eq, %arg1, %c0_i32 : i32
    %1 = arith.extui %0 : i1 to i32
    %c0_i32_0 = arith.constant 0 : i32
    %2 = arith.cmpi ne, %1, %c0_i32_0 : i32
    scf.if %2 {
      %cst_11 = arith.constant 0.000000e+00 : f32
      %27 = vector.broadcast %cst_11 : f32 to vector<16x128xf32>
      %c0_12 = arith.constant 0 : index
      %c0_13 = arith.constant 0 : index
      %28 = vector.load %arg5[%c0_12, %c0_13] : memref<16x128xf32, #tpu.memory_space<vmem>>, vector<16x128xf32>
      tpu.vector_store %arg5[%c0_12, %c0_13], %27 {strides = array<i32>} : memref<16x128xf32, #tpu.memory_space<vmem>>, vector<16x128xf32>,
    } else {
    }
    %c0 = arith.constant 0 : index
    %c0_1 = arith.constant 0 : index
    %3 = vector.load %arg2[%c0, %c0_1] : memref<16x128xf32, #tpu.memory_space<vmem>>, vector<16x128xf32>
    %c0_2 = arith.constant 0 : index
    %c0_3 = arith.constant 0 : index
    %4 = vector.load %arg3[%c0_2, %c0_3] : memref<16x128xf32, #tpu.memory_space<vmem>>, vector<16x128xf32>
    %c0_4 = arith.constant 0 : index
    %c0_5 = arith.constant 0 : index
    %5 = vector.load %arg5[%c0_4, %c0_5] : memref<16x128xf32, #tpu.memory_space<vmem>>, vector<16x128xf32>
    %cst = arith.constant 0.000000e+00 : f32
    %6 = vector.broadcast %cst : f32 to vector<16x128xf32>
    %7 = arith.maximumf %3, %6 : vector<16x128xf32>
    %8 = vector.broadcast %cst : f32 to vector<16x128xf32>
    %9 = arith.subf %3, %8 : vector<16x128xf32>
    %10 = arith.cmpf one, %9, %9 : vector<16x128xf32>
    %11 = vector.broadcast %cst : f32 to vector<16x128xf32>
    %12 = arith.addf %3, %11 : vector<16x128xf32>
    %13 = math.absf %9 : vector<16x128xf32>
    %cst_6 = arith.constant 0.000000e+00 : f32
    %14 = vector.broadcast %cst_6 : f32 to vector<16x128xf32>
    %15 = arith.subf %14, %13 : vector<16x128xf32>
    %16 = math.exp %15 : vector<16x128xf32>
    %17 = math.log1p %16 : vector<16x128xf32>
    %18 = arith.addf %7, %17 : vector<16x128xf32>
    %19 = arith.select %10, %12, %18 : vector<16x128xi1>, vector<16x128xf32>
    %20 = arith.mulf %4, %3 : vector<16x128xf32>
    %21 = arith.subf %19, %20 : vector<16x128xf32>
    %22 = arith.addf %5, %21 : vector<16x128xf32>
    %c0_7 = arith.constant 0 : index
    %c0_8 = arith.constant 0 : index
    %23 = vector.load %arg5[%c0_7, %c0_8] : memref<16x128xf32, #tpu.memory_space<vmem>>, vector<16x128xf32>
    tpu.vector_store %arg5[%c0_7, %c0_8], %22 {strides = array<i32>} : memref<16x128xf32, #tpu.memory_space<vmem>>, vector<16x128xf32>,
    %c0_i32_9 = arith.constant 0 : i32
    %24 = arith.cmpi eq, %arg1, %c0_i32_9 : i32
    %25 = arith.extui %24 : i1 to i32
    %c0_i32_10 = arith.constant 0 : i32
    %26 = arith.cmpi ne, %25, %c0_i32_10 : i32
    scf.if %26 {
      %c0_11 = arith.constant 0 : index
      %c0_12 = arith.constant 0 : index
      %27 = vector.load %arg5[%c0_11, %c0_12] : memref<16x128xf32, #tpu.memory_space<vmem>>, vector<16x128xf32>
      %28 = vector.shape_cast %27 : vector<16x128xf32> to vector<1x16x128xf32>
      %cst_13 = arith.constant dense<0.000000e+00> : vector<1xf32>
      %29 = vector.multi_reduction <add>, %28, %cst_13 [1, 2] : vector<1x16x128xf32> to vector<1xf32>
      %30 = vector.shape_cast %29 : vector<1xf32> to vector<1x1x1xf32>
      %31 = vector.extract %30[0, 0, 0] : f32 from vector<1x1x1xf32>
      %32 = tpu.iota {dimensions = array<i32: 0>} : vector<8x128xi32>
      %33 = tpu.iota {dimensions = array<i32: 1>} : vector<8x128xi32>
      %c0_i32_14 = arith.constant 0 : i32
      %34 = vector.broadcast %c0_i32_14 : i32 to vector<8x128xi32>
      %35 = arith.cmpi eq, %32, %34 : vector<8x128xi32>
      %c0_i32_15 = arith.constant 0 : i32
      %36 = vector.broadcast %c0_i32_15 : i32 to vector<8x128xi32>
      %37 = arith.cmpi eq, %33, %36 : vector<8x128xi32>
      %38 = arith.andi %35, %37 : vector<8x128xi1>
      %cst_16 = arith.constant 0.000000e+00 : f32
      %39 = vector.broadcast %31 : f32 to vector<8x128xf32>
      %40 = vector.broadcast %cst_16 : f32 to vector<8x128xf32>
      %41 = arith.select %38, %39, %40 : vector<8x128xi1>, vector<8x128xf32>
      %c0_17 = arith.constant 0 : index
      %c0_18 = arith.constant 0 : index
      %42 = vector.load %arg4[%c0_17, %c0_18] : memref<8x128xf32, #tpu.memory_space<vmem>>, vector<8x128xf32>
      tpu.vector_store %arg4[%c0_17, %c0_18], %41 {strides = array<i32>} : memref<8x128xf32, #tpu.memory_space<vmem>>, vector<8x128xf32>,
    } else {
    }
    return
  }
  func.func @transform_0(%arg0: i32, %arg1: i32) -> (i32, i32) {
    %c1_i32 = arith.constant 1 : i32
    %0 = arith.muli %arg0, %c1_i32 : i32
    %1 = arith.addi %0, %arg1 : i32
    %c0_i32 = arith.constant 0 : i32
    %c0_i32_0 = arith.constant 0 : i32
    return %1, %c0_i32 : i32, i32
  }
  func.func @transform_1(%arg0: i32, %arg1: i32) -> (i32, i32) {
    %c1_i32 = arith.constant 1 : i32
    %0 = arith.muli %arg0, %c1_i32 : i32
    %1 = arith.addi %0, %arg1 : i32
    %c0_i32 = arith.constant 0 : i32
    %c0_i32_0 = arith.constant 0 : i32
    return %1, %c0_i32 : i32, i32
  }
  func.func @transform_2(%arg0: i32, %arg1: i32) -> (i32, i32) {
    %c0_i32 = arith.constant 0 : i32
    %c0_i32_0 = arith.constant 0 : i32
    return %arg0, %c0_i32 : i32, i32
  }
}

</mosaic_0001>

<llo_original>
// kernel: tpu_custom_call.1
$region0: #{tpu_custom_call.1}
  #allocation0 [shape = 'u32[]', space=smem, size = 0x4, offset = 0x4, fixed_abs, tag = 'smem constant byte address 0x4 - core index']
  #allocation1 [shape = 'u32[144,128]{1,0:T(1,128)}', space=vmem, size = 0x12000, scoped, tag = 'internal scratch']
  #allocation2 [shape = 'f32[16,128]{1,0:T(8,128)}', space=vmem, size = 0x2000, scoped, tag = 'scratch operand']
  %s0 = inlined_call_operand.hbm [shape: f32[16,128], index: 0, kind: input, shape index: {}]
  %s1 = inlined_call_operand.hbm [shape: f32[16,128], index: 1, kind: input, shape index: {}]
  %s2 = inlined_call_operand.hbm [shape: f32[8,128], index: 2, kind: output, shape index: {}]
  %s3 = sld [smem:[#allocation0]]
  $region34: #{tpu_custom_call.1} parent=0
    _
  %s5 = ssub.s32 1, %s3
  %s6 = scalar_select 0, %s5, %s3
  $region1: #{tpu_custom_call.1} parent=0
    #allocation3 [shape = 'u8[8192]{0}', space=vmem, size = 0x2000, scoped, tag = 'input window, operand 0, single buffered']
    #allocation4 [shape = 's32[1]{0}', space=sflag, size = 0x4, scoped, tag = 'scoped memory for tpu_custom_call.1']
    #allocation5 [shape = 's32[1]{0}', space=sflag, size = 0x4, scoped, tag = 'scoped memory for tpu_custom_call.1']
    #allocation6 [shape = 'u8[8192]{0}', space=vmem, size = 0x2000, scoped, tag = 'input window, operand 1, single buffered']
    #allocation7 [shape = 's32[1]{0}', space=sflag, size = 0x4, scoped, tag = 'scoped memory for tpu_custom_call.1']
    #allocation8 [shape = 'u8[4096]{0}', space=vmem, size = 0x1000, scoped, tag = 'output window, operand 0, single buffered']
    %7 = vsyncpa [#allocation4], 0
    %8 = vsyncpa [#allocation7], 0
    %9 = vsyncpa [#allocation5], 0
    // Predicated region
    $region2: #{tpu_custom_call.1} parent=1 // pred_check
      _
    $region3: #{tpu_custom_call.1} parent=1 // pred_check_branch
      %11 = sbr.rel (0) target = $region5
    $region4: #{tpu_custom_call.1} parent=1 // pred_region
      %s12 = sadd.s32 0, 0
      %s13 = smul.u32 2, %s12
      %s15 = ssub.s32 256, 256
      %16 = vsyncadd [#allocation4], %s15
      %s17 = smul.addr %s13, 128
      %s18 = scalar_lea.hbm %s0, %s17
      %s19 = sshll.u32 [#allocation3], 4
      %s20 = int_to_ptr.vmem [resolvable:$true] %s19
      %25 = dma.hbm_to_vmem [thread:$0]  %s18, 256, %s20, [#allocation4], 128, 128, 8
    $region5: #{tpu_custom_call.1} parent=1 // pred_fallthru
      _
    // Predicated region
    $region6: #{tpu_custom_call.1} parent=1 // pred_check
      _
    $region7: #{tpu_custom_call.1} parent=1 // pred_check_branch
      %27 = sbr.rel (0) target = $region9
    $region8: #{tpu_custom_call.1} parent=1 // pred_region
      %s28 = sadd.s32 0, 0
      %s29 = smul.u32 2, %s28
      %s31 = ssub.s32 256, 256
      %32 = vsyncadd [#allocation7], %s31
      %s33 = smul.addr %s29, 128
      %s34 = scalar_lea.hbm %s1, %s33
      %s35 = sshll.u32 [#allocation6], 4
      %s36 = int_to_ptr.vmem [resolvable:$true] %s35
      %41 = dma.hbm_to_vmem [thread:$0]  %s34, 256, %s36, [#allocation7], 128, 128, 8
    $region9: #{tpu_custom_call.1} parent=1 // pred_fallthru
      _
    // Predicated region
    $region10: #{tpu_custom_call.1} parent=1 // pred_check
      _
    $region11: #{tpu_custom_call.1} parent=1 // pred_check_branch
      %43 = sbr.rel (0) target = $region13
    $region12: #{tpu_custom_call.1} parent=1 // pred_region
      %44 = dma.done [#allocation4], 256
    $region13: #{tpu_custom_call.1} parent=1 // pred_fallthru
      _
    // Predicated region
    $region14: #{tpu_custom_call.1} parent=1 // pred_check
      _
    $region15: #{tpu_custom_call.1} parent=1 // pred_check_branch
      %46 = sbr.rel (0) target = $region17
    $region16: #{tpu_custom_call.1} parent=1 // pred_region
      %47 = dma.done [#allocation7], 256
    $region17: #{tpu_custom_call.1} parent=1 // pred_fallthru
      _
    %s48 = sadd.s32 0, 0
    %s49 = smul.u32 2, %s48
    %s50 = sadd.s32 0, 0
    %s51 = smul.u32 2, %s50
    %p52 = scmp.eq.s32.totalorder 0, 0
    // Predicated region
    $region18: #{tpu_custom_call.1} parent=1 // pred_check
      %p53 = pneg %p52
    $region19: #{tpu_custom_call.1} parent=1 // pred_check_branch
      %55 = sbr.rel (%p53) target = $region21
    $region20: #{tpu_custom_call.1} parent=1 // pred_region
      %56 = vst [vmem:[#allocation2] sm:$0xff] 0.0
      %57 = vst [vmem:[#allocation2 + $0x8] sm:$0xff] 0.0
    $region21: #{tpu_custom_call.1} parent=1 // pred_fallthru
      _
    %v58 = vld [vmem:[#allocation3] sm:$0xff]
    %v59 = vld [vmem:[#allocation3 + $0x8] sm:$0xff]
    %v60 = vld [vmem:[#allocation6] sm:$0xff]
    %v61 = vld [vmem:[#allocation6 + $0x8] sm:$0xff]
    %v62 = vld [vmem:[#allocation2] sm:$0xff]
    %v63 = vld [vmem:[#allocation2 + $0x8] sm:$0xff]
    %v64 = vmax.f32 %v58, 0.0
    %v65 = vmax.f32 %v59, 0.0
    %vm66 = vcmp.ne.f32.partialorder %v58, %v58
    %vm67 = vcmp.ne.f32.partialorder %v59, %v59
    %v68 = vadd.f32 %v58, 0.0
    %v69 = vadd.f32 %v59, 0.0
    %v70 = vand.u32 2147483647, %v58
    %v71 = vand.u32 2147483647, %v59
    %v72 = vsub.f32 0.0, %v70
    %v73 = vsub.f32 0.0, %v71
    %v74 = vmul.f32 %v72, 1.442695
    %v75 = vpow.pop %v74
    %v76 = vmul.f32 %v73, 1.442695
    %v77 = vpow.pop %v76
    %v78 = vadd.f32 %v75, 1.0
    %v79 = vlog2.pop %v78
    %v80 = vmul.f32 %v79, 0.6931472
    %v81 = vmul.f32 -0.5, %v75
    %v82 = vadd.f32 %v81, 1.0
    %v83 = vmul.f32 %v82, %v75
    %v84 = vand.u32 2147483647, %v75
    %vm85 = vcmp.lt.f32.partialorder %v84, 0.0004427343
    %v86 = vsel %vm85, %v83, %v80
    %v87 = vadd.f32 %v77, 1.0
    %v88 = vlog2.pop %v87
    %v89 = vmul.f32 %v88, 0.6931472
    %v90 = vmul.f32 -0.5, %v77
    %v91 = vadd.f32 %v90, 1.0
    %v92 = vmul.f32 %v91, %v77
    %v93 = vand.u32 2147483647, %v77
    %vm94 = vcmp.lt.f32.partialorder %v93, 0.0004427343
    %v95 = vsel %vm94, %v92, %v89
    %v96 = vadd.f32 %v64, %v86
    %v97 = vadd.f32 %v65, %v95
    %v98 = vsel %vm66, %v68, %v96
    %v99 = vsel %vm67, %v69, %v97
    %v100 = vmul.f32 %v60, %v58
    %v101 = vmul.f32 %v61, %v59
    %v102 = vsub.f32 %v98, %v100
    %v103 = vsub.f32 %v99, %v101
    %v104 = vadd.f32 %v62, %v102
    %v105 = vadd.f32 %v63, %v103
    %106 = vst [vmem:[#allocation2] sm:$0xff] %v104
    %107 = vst [vmem:[#allocation2 + $0x8] sm:$0xff] %v105
    // Predicated region
    $region22: #{tpu_custom_call.1} parent=1 // pred_check
      %p108 = pneg %p52
    $region23: #{tpu_custom_call.1} parent=1 // pred_check_branch
      %110 = sbr.rel (%p108) target = $region25
    $region24: #{tpu_custom_call.1} parent=1 // pred_region
      %v111 = vld [vmem:[#allocation2] sm:$0xff]
      %v112 = vld [vmem:[#allocation2 + $0x8] sm:$0xff]
      %v113 = vadd.f32 %v111, %v112
      %114 = vadd.xlane.f32.xlu0 %v113
      %v115 = vpop.xlane.xlu0 %114
      %v116 = vrot.slane %v115, 4
      %v117 = vadd.f32 %v115, %v116
      %v118 = vrot.slane %v117, 2
      %v119 = vadd.f32 %v117, %v118
      %v120 = vrot.slane %v119, 1
      %v121 = vadd.f32 %v119, %v120
      %s122 = vtos %v121
      %v123 = vlaneseq
      %v124 = vshrl.u32 %v123, 7
      %v125 = vlaneseq
      %v126 = vand.u32 %v125, 127
      %vm127 = vcmp.eq.s32.totalorder %v124, 0
      %vm128 = vcmp.eq.s32.totalorder %v126, 0
      %vm129 = vmand %vm127, %vm128
      %v130 = vstv %s122
      %v131 = vsel %vm129, %v130, 0.0
      %132 = vst [vmem:[#allocation8] sm:$0xff] %v131
    $region25: #{tpu_custom_call.1} parent=1 // pred_fallthru
      _
    // Predicated region
    $region26: #{tpu_custom_call.1} parent=1 // pred_check
      _
    $region27: #{tpu_custom_call.1} parent=1 // pred_check_branch
      %134 = sbr.rel (0) target = $region29
    $region28: #{tpu_custom_call.1} parent=1 // pred_region
      %s136 = ssub.s32 128, 128
      %137 = vsyncadd [#allocation5], %s136
      %s139 = sshll.u32 [#allocation8], 4
      %s140 = int_to_ptr.vmem [resolvable:$true] %s139
      %142 = dma.vmem_to_hbm [thread:$0]  %s140, 128, %s2, [#allocation5]
    $region29: #{tpu_custom_call.1} parent=1 // pred_fallthru
      _
    // Predicated region
    $region30: #{tpu_custom_call.1} parent=1 // pred_check
      _
    $region31: #{tpu_custom_call.1} parent=1 // pred_check_branch
      %144 = sbr.rel (0) target = $region33
    $region32: #{tpu_custom_call.1} parent=1 // pred_region
      %145 = dma.done [#allocation5], 128
    $region33: #{tpu_custom_call.1} parent=1 // pred_fallthru
      _
    %146 = vsyncpa [#allocation4], 1
    %147 = vsyncpa [#allocation7], 1
    %148 = vsyncpa [#allocation5], 1

</llo_original>
